<compile_context>
chip_gen: v5e
topology: v5e:2x2
jax: 0.10.0
libtpu: 0.0.40
codegen_flags: <defaults>
</compile_context>

<pallas_src>
import jax
import jax.numpy as jnp
from jax.experimental import pallas as pl
from jax.experimental.pallas import tpu as pltpu

LANE = 128


def _round_up(x, m):
    return ((x + m - 1) // m) * m


# ---------------------------------------------------------------------------
# Stage 1: XW = X @ W1, computed once (hoisted out of the aggregation loop).
# ---------------------------------------------------------------------------
def xw_kernel(x_ref, w1_ref, o_ref):
    o_ref[...] = jnp.dot(
        x_ref[...], w1_ref[...], preferred_element_type=jnp.float32
    ).astype(o_ref.dtype)


# ---------------------------------------------------------------------------
# Stage 2: out = relu(A_hat @ XW + b1) @ W2_pad + b2, tiled over (row, k).
#   - k (contraction over nodes) is the LAST grid axis, marked "arbitrary".
#   - acc_ref is a persistent f32 VMEM accumulator for the current row tile.
#   - output block is lane-dense (tile_n, 128); real result lives in lane 0.
# ---------------------------------------------------------------------------
def gcn_agg_kernel(a_ref, xw_ref, b1_ref, w2_ref, b2_ref, o_ref, acc_ref):
    k = pl.program_id(1)

    @pl.when(k == 0)
    def _():
        acc_ref[...] = jnp.zeros_like(acc_ref)

    # bf16 x bf16 -> f32 accumulation on the MXU.
    acc_ref[...] += jnp.dot(
        a_ref[...], xw_ref[...], preferred_element_type=jnp.float32
    )

    @pl.when(k == pl.num_programs(1) - 1)
    def _():
        # Bias + ReLU + output head kept in f32.
        h = jnp.maximum(acc_ref[...] + b1_ref[...], 0.0)
        out = jnp.dot(h, w2_ref[...], preferred_element_type=jnp.float32)
        o_ref[...] = (out + b2_ref[...]).astype(o_ref.dtype)


def gcn_forward(a_hat, x, w1, b1, w2, b2, *, tile_n=128):
    """Full forward pass. a_hat: [N, N], x: [N, F], w1: [F, H], b1: [1, H],
    w2: [H, 1], b2: [1, 1]. Returns [N] (the .squeeze() of the PyTorch head)."""
    n, f_in = x.shape
    hidden = w1.shape[1]

    n_pad = _round_up(n, tile_n)
    f_pad = _round_up(f_in, LANE)
    h_pad = _round_up(hidden, LANE)

    # Zero-pad to lane/tile-aligned shapes (wrapper glue).
    a_p = jnp.zeros((n_pad, n_pad), jnp.float32).at[:n, :n].set(a_hat)
    x_p = jnp.zeros((n_pad, f_pad), jnp.float32).at[:n, :f_in].set(x)
    w1_p = jnp.zeros((f_pad, h_pad), jnp.float32).at[:f_in, :hidden].set(w1)
    b1_p = jnp.zeros((1, h_pad), jnp.float32).at[:, :hidden].set(b1)
    # Lane-dense head: pad W2 to (h_pad, 128); only output lane 0 is real.
    w2_p = jnp.zeros((h_pad, LANE), jnp.float32).at[:hidden, 0:1].set(w2)
    b2_p = jnp.zeros((1, LANE), jnp.float32).at[0, 0].set(b2[0, 0])

    # bf16 operands for the MXU-heavy matmuls (f32 accumulation in-kernel).
    a_bf = a_p.astype(jnp.bfloat16)
    x_bf = x_p.astype(jnp.bfloat16)
    w1_bf = w1_p.astype(jnp.bfloat16)

    # ---- Stage 1: XW = X @ W1 (computed once, stored as bf16) ----
    xw = pl.pallas_call(
        xw_kernel,
        out_shape=jax.ShapeDtypeStruct((n_pad, h_pad), jnp.bfloat16),
        grid=(n_pad // tile_n,),
        in_specs=[
            pl.BlockSpec((tile_n, f_pad), lambda i: (i, 0)),
            pl.BlockSpec((f_pad, h_pad), lambda i: (0, 0)),
        ],
        out_specs=pl.BlockSpec((tile_n, h_pad), lambda i: (i, 0)),
        compiler_params=pltpu.CompilerParams(
            dimension_semantics=("parallel",)),
    )(x_bf, w1_bf)

    # ---- Stage 2: tiled aggregation + ReLU + output head ----
    grid = (n_pad // tile_n, n_pad // tile_n)  # (row tiles, k tiles), k last
    out_p = pl.pallas_call(
        gcn_agg_kernel,
        out_shape=jax.ShapeDtypeStruct((n_pad, LANE), jnp.float32),
        grid=grid,
        in_specs=[
            pl.BlockSpec((tile_n, tile_n), lambda i, k: (i, k)),  # A_hat tile
            pl.BlockSpec((tile_n, h_pad), lambda i, k: (k, 0)),   # XW tile
            pl.BlockSpec((1, h_pad), lambda i, k: (0, 0)),        # b1
            pl.BlockSpec((h_pad, LANE), lambda i, k: (0, 0)),     # W2 (lane-padded)
            pl.BlockSpec((1, LANE), lambda i, k: (0, 0)),         # b2
        ],
        out_specs=pl.BlockSpec((tile_n, LANE), lambda i, k: (i, 0)),
        scratch_shapes=[pltpu.VMEM((tile_n, h_pad), jnp.float32)],
        compiler_params=pltpu.CompilerParams(
            dimension_semantics=("parallel", "arbitrary")),
    )(a_bf, xw, b1_p, w2_p, b2_p)

    # .squeeze() glue: strip row padding and take the real output lane.
    return out_p[:n, 0]


def normalized_adjacency(edge_index, num_nodes):
    """Dense D^-1/2 (A + I) D^-1/2 as used by GCNConv (add_self_loops=True)."""
    # TODO(synk): for large sparse graphs, replace the dense A_hat matmul with a
    # PrefetchScalarGridSpec gather formulation over neighbor/row-offset tables.
    src, dst = edge_index[0], edge_index[1]
    a = jnp.zeros((num_nodes, num_nodes), jnp.float32)
    # out[i] aggregates messages from j over edges j->i  =>  A[dst, src] = 1
    a = a.at[dst, src].set(1.0)
    a = a + jnp.eye(num_nodes, dtype=jnp.float32)  # self loops
    deg = a.sum(axis=1)
    d_inv_sqrt = jnp.where(deg > 0, 1.0 / jnp.sqrt(deg), 0.0)
    return d_inv_sqrt[:, None] * a * d_inv_sqrt[None, :]


if __name__ == "__main__":
    key = jax.random.PRNGKey(0)
    k_x, k_w1, k_b1, k_w2, k_b2 = jax.random.split(key, 5)

    num_nodes = 200       # pads to 256 -> 2x2 grid (exercises tiling + padding)
    in_channels = 8
    hidden = 16

    # Node features
    x = jax.random.normal(k_x, (num_nodes, in_channels), jnp.float32)

    # Deterministic small graph: a bidirectional ring over the nodes
    idx = jnp.arange(num_nodes, dtype=jnp.int32)
    src = jnp.concatenate([idx, (idx + 1) % num_nodes])
    dst = jnp.concatenate([(idx + 1) % num_nodes, idx])
    edge_index = jnp.stack([src, dst], axis=0)  # [2, E]

    # Parameters (GCNConv weight [in, 16] + bias, Linear(16, 1))
    w1 = jax.random.normal(k_w1, (in_channels, hidden), jnp.float32) * 0.1
    b1 = jax.random.normal(k_b1, (1, hidden), jnp.float32) * 0.1
    w2 = jax.random.normal(k_w2, (hidden, 1), jnp.float32) * 0.1
    b2 = jax.random.normal(k_b2, (1, 1), jnp.float32) * 0.1

    a_hat = normalized_adjacency(edge_index, num_nodes)

    out = gcn_forward(a_hat, x, w1, b1, w2, b2)
    jax.block_until_ready(out)
    assert out.shape == (num_nodes,)

    # Reference 1: reproduces the kernel's mixed-precision steps (bf16 operands,
    # f32 accumulation) -> tight tolerance.
    f32 = jnp.float32
    hi = jax.lax.Precision.HIGHEST
    a_bf = a_hat.astype(jnp.bfloat16).astype(f32)
    x_bf = x.astype(jnp.bfloat16).astype(f32)
    w1_bf = w1.astype(jnp.bfloat16).astype(f32)
    xw_bf = jnp.dot(x_bf, w1_bf, precision=hi).astype(jnp.bfloat16).astype(f32)
    h_ref = jnp.maximum(jnp.dot(a_bf, xw_bf, precision=hi) + b1, 0.0)
    ref_bf16 = (jnp.dot(h_ref, w2, precision=hi) + b2)[:, 0]
    assert jnp.allclose(out, ref_bf16, atol=1e-3, rtol=1e-3), "mismatch vs bf16-aware ref"

    # Reference 2: pure-f32 PyTorch-semantics reference -> loose tolerance
    # (difference is only the bf16 quantization of the matmul operands).
    ref_f32 = (jnp.maximum(a_hat @ (x @ w1) + b1, 0.0) @ w2 + b2)[:, 0]
    assert jnp.allclose(out, ref_f32, atol=5e-2, rtol=5e-2), "mismatch vs f32 ref"

    print("KERNEL_OK")
</pallas_src>

<mosaic_0001>
module attributes {stable_mosaic.version = 11 : i64} {
  func.func @xw_kernel(%arg0: i32, %arg1: memref<128x128xbf16, #tpu.memory_space<vmem>>, %arg2: memref<128x128xbf16, #tpu.memory_space<vmem>>, %arg3: memref<128x128xbf16, #tpu.memory_space<vmem>>) attributes {dimension_semantics = [#tpu.dimension_semantics<parallel>], iteration_bounds = array<i64: 2>, scalar_prefetch = 0 : i64, scratch_operands = 0 : i64, tpu.core_type = #tpu.core_type<tc>, window_params = [{transform_indices = @transform_0, window_bounds = array<i64: 128, 128>}, {pipeline_mode = #tpu.pipeline_mode<synchronous>, transform_indices = @transform_1, window_bounds = array<i64: 128, 128>}, {transform_indices = @transform_2, window_bounds = array<i64: 128, 128>}]} {
    %c0 = arith.constant 0 : index
    %c0_0 = arith.constant 0 : index
    %0 = vector.load %arg1[%c0, %c0_0] : memref<128x128xbf16, #tpu.memory_space<vmem>>, vector<128x128xbf16>
    %c0_1 = arith.constant 0 : index
    %c0_2 = arith.constant 0 : index
    %1 = vector.load %arg2[%c0_1, %c0_2] : memref<128x128xbf16, #tpu.memory_space<vmem>>, vector<128x128xbf16>
    %cst = arith.constant dense<0.000000e+00> : vector<128x128xf32>
    %2 = tpu.matmul %0, %1, %cst {dimension_numbers = #tpu.dot_dimension_numbers<[1], [0], [0], [1], [0, 0, 1, 1], [], []>} : vector<128x128xbf16>, vector<128x128xbf16>, vector<128x128xf32> -> vector<128x128xf32>
    %3 = arith.truncf %2 : vector<128x128xf32> to vector<128x128xbf16>
    %c0_3 = arith.constant 0 : index
    %c0_4 = arith.constant 0 : index
    %4 = vector.load %arg3[%c0_3, %c0_4] : memref<128x128xbf16, #tpu.memory_space<vmem>>, vector<128x128xbf16>
    tpu.vector_store %arg3[%c0_3, %c0_4], %3 {strides = array<i32>} : memref<128x128xbf16, #tpu.memory_space<vmem>>, vector<128x128xbf16>,
    return
  }
  func.func @transform_0(%arg0: i32) -> (i32, i32) {
    %c0_i32 = arith.constant 0 : i32
    %c0_i32_0 = arith.constant 0 : i32
    return %arg0, %c0_i32 : i32, i32
  }
  func.func @transform_1(%arg0: i32) -> (i32, i32) {
    %c0_i32 = arith.constant 0 : i32
    %c0_i32_0 = arith.constant 0 : i32
    %c0_i32_1 = arith.constant 0 : i32
    return %c0_i32, %c0_i32_0 : i32, i32
  }
  func.func @transform_2(%arg0: i32) -> (i32, i32) {
    %c0_i32 = arith.constant 0 : i32
    %c0_i32_0 = arith.constant 0 : i32
    return %arg0, %c0_i32 : i32, i32
  }
}

</mosaic_0001>

<llo_original>
// kernel: tpu_custom_call.1
$region0: #{tpu_custom_call.1}
  #allocation0 [shape = 'u32[]', space=smem, size = 0x4, offset = 0x4, fixed_abs, tag = 'smem constant byte address 0x4 - core index']
  #allocation1 [shape = 'u32[72,128]{1,0:T(1,128)}', space=vmem, size = 0x9000, scoped, tag = 'internal scratch']
  %s0 = inlined_call_operand.hbm [shape: bf16[256,128], index: 0, kind: input, shape index: {}]
  %s1 = inlined_call_operand.hbm [shape: bf16[128,128], index: 1, kind: input, shape index: {}]
  %s2 = inlined_call_operand.hbm [shape: bf16[256,128], index: 2, kind: output, shape index: {}]
  %s3 = sld [smem:[#allocation0]]
  $region49: #{tpu_custom_call.1} parent=0
    _
  %s5 = ssub.s32 1, %s3
  %s6 = scalar_select 0, %s5, %s3
  $region1: #{tpu_custom_call.1} parent=0
    #allocation2 [shape = 'u8[65536]{0}', space=vmem, size = 0x10000, scoped, tag = 'input window, operand 0']
    #allocation3 [shape = 's32[2]{0}', space=sflag, size = 0x8, scoped, tag = 'scoped memory for tpu_custom_call.1']
    #allocation4 [shape = 's32[2]{0}', space=sflag, size = 0x8, scoped, tag = 'scoped memory for tpu_custom_call.1']
    #allocation5 [shape = 'u8[32768]{0}', space=vmem, size = 0x8000, scoped, tag = 'input window, operand 1, single buffered']
    #allocation6 [shape = 's32[1]{0}', space=sflag, size = 0x4, scoped, tag = 'scoped memory for tpu_custom_call.1']
    #allocation7 [shape = 'u8[65536]{0}', space=vmem, size = 0x10000, scoped, tag = 'output window, operand 0']
    %7 = vsyncpa [#allocation3], 0
    %s8 = scalar_lea.sflag [#allocation3], 1
    %9 = vsyncpa %s8, 0
    %10 = vsyncpa [#allocation6], 0
    %11 = vsyncpa [#allocation4], 0
    %s12 = scalar_lea.sflag [#allocation4], 1
    %13 = vsyncpa %s12, 0
    loop: start=0, step=1, limit=4
    $region2: #{tpu_custom_call.1} parent=1 // loop_pre_header
      _
    $region3: #{tpu_custom_call.1} parent=1 // loop_header
      %s15 = sphi 0, %s19
      %p16 = scmp.ge.s32.totalorder %s15, 4
      %s25 = sphi 0, %s27
      %s28 = sphi 0, %s25
      %s29 = sphi 0, %s28
      %s45 = sphi 0, %s29
      %s49 = sphi 0, %s49
      %s51 = sphi 0, %s49
      %s52 = sphi 0, %s51
      %s66 = sphi 0, %s52
      %s72 = sphi 0, %s74
      %s75 = sphi 0, %s72
      %s76 = sphi 0, %s75
      %s92 = sphi 0, %s76
    $region4: #{tpu_custom_call.1} parent=1 // loop_header_branch
      %18 = sbr.rel (%p16) target = $region8
    $region5: #{tpu_custom_call.1} parent=1 // loop_body
      %s20 = ssub.s32 %s15, 1
      %s21 = ssub.s32 %s15, 2
      %s22 = sadd.s32 %s15, 1
      %s23 = ssub.s32 %s15, %s22
      %p24 = scmp.eq.s32.totalorder %s23, 0
      %s26 = sadd.s32 %s25, 1
      %s27 = scalar_select %p24, %s25, %s26
      %p30 = pneg %p24
      %p31 = scmp.eq.s32.totalorder %s15, 1
      %p32 = por %p30, %p31
      %p33 = scmp.ne.s32.totalorder %s25, %s28
      %p34 = scmp.eq.s32.totalorder %s15, 0
      %p35 = por %p33, %p34
      %p36 = scmp.ne.s32.totalorder %s25, %s28
      %p37 = scmp.eq.s32.totalorder %s20, 1
      %p38 = por %p36, %p37
      %p39 = scmp.ne.s32.totalorder %s28, %s29
      %p40 = scmp.eq.s32.totalorder %s20, 0
      %p41 = por %p39, %p40
      %p42 = scmp.ne.s32.totalorder %s28, %s29
      %p43 = scmp.eq.s32.totalorder %s21, 1
      %p44 = por %p42, %p43
      %p46 = scmp.ne.s32.totalorder %s29, %s45
      %p47 = scmp.eq.s32.totalorder %s21, 0
      %p48 = por %p46, %p47
      %s50 = sadd.s32 %s49, 1
      %p53 = scmp.eq.s32.totalorder %s15, 1
      %p54 = scmp.ne.s32.totalorder %s49, %s51
      %p55 = scmp.eq.s32.totalorder %s15, 0
      %p56 = por %p54, %p55
      %p57 = scmp.ne.s32.totalorder %s49, %s51
      %p58 = scmp.eq.s32.totalorder %s20, 1
      %p59 = por %p57, %p58
      %p60 = scmp.ne.s32.totalorder %s51, %s52
      %p61 = scmp.eq.s32.totalorder %s20, 0
      %p62 = por %p60, %p61
      %p63 = scmp.ne.s32.totalorder %s51, %s52
      %p64 = scmp.eq.s32.totalorder %s21, 1
      %p65 = por %p63, %p64
      %p67 = scmp.ne.s32.totalorder %s52, %s66
      %p68 = scmp.eq.s32.totalorder %s21, 0
      %p69 = por %p67, %p68
      %s70 = ssub.s32 %s15, %s22
      %p71 = scmp.eq.s32.totalorder %s70, 0
      %s73 = sadd.s32 %s72, 1
      %s74 = scalar_select %p71, %s72, %s73
      %p77 = pneg %p71
      %p78 = scmp.eq.s32.totalorder %s15, 1
      %p79 = por %p77, %p78
      %p80 = scmp.ne.s32.totalorder %s72, %s75
      %p81 = scmp.eq.s32.totalorder %s15, 0
      %p82 = por %p80, %p81
      %p83 = scmp.ne.s32.totalorder %s72, %s75
      %p84 = scmp.eq.s32.totalorder %s20, 1
      %p85 = por %p83, %p84
      %p86 = scmp.ne.s32.totalorder %s75, %s76
      %p87 = scmp.eq.s32.totalorder %s20, 0
      %p88 = por %p86, %p87
      %p89 = scmp.ne.s32.totalorder %s75, %s76
      %p90 = scmp.eq.s32.totalorder %s21, 1
      %p91 = por %p89, %p90
      %p93 = scmp.ne.s32.totalorder %s76, %s92
      %p94 = scmp.eq.s32.totalorder %s21, 0
      %p95 = por %p93, %p94
      %p96 = scmp.le.s32.totalorder 1, %s15
      %p97 = scmp.lt.s32.totalorder %s15, 3
      %p98 = pnand %p96, %p97
      %p99 = pneg %p98
      // Predicated region
      $region9: #{tpu_custom_call.1} parent=5 // pred_check
        _
      $region10: #{tpu_custom_call.1} parent=5 // pred_check_branch
        %101 = sbr.rel (%p98) target = $region12
      $region11: #{tpu_custom_call.1} parent=5 // pred_region
        %s102 = ssub.s32 %s15, 1
        // Predicated region
        $region13: #{tpu_custom_call.1} parent=11 // pred_check
          %p103 = pneg %p62
        $region14: #{tpu_custom_call.1} parent=11 // pred_check_branch
          %105 = sbr.rel (%p103) target = $region16
        $region15: #{tpu_custom_call.1} parent=11 // pred_region
          %107 = vsyncadd [#allocation6], 0
          %s108 = sshll.u32 %s1, 4
          %s109 = int_to_ptr.hbm [resolvable:$true] %s108
          %s110 = sshll.u32 [#allocation5], 4
          %s111 = int_to_ptr.vmem [resolvable:$true] %s110
          %116 = dma.hbm_to_vmem [thread:$0]  %s109, 1024, %s111, [#allocation6], 64, 64, 4
        $region16: #{tpu_custom_call.1} parent=11 // pred_fallthru
          _
      $region12: #{tpu_custom_call.1} parent=5 // pred_fallthru
        _
      %p117 = scmp.lt.s32.totalorder %s15, 2
      // Predicated region
      $region17: #{tpu_custom_call.1} parent=5 // pred_check
        %p118 = pneg %p117
      $region18: #{tpu_custom_call.1} parent=5 // pred_check_branch
        %120 = sbr.rel (%p118) target = $region20
      $region19: #{tpu_custom_call.1} parent=5 // pred_region
        // Predicated region
        $region21: #{tpu_custom_call.1} parent=19 // pred_check
          %p121 = pneg %p35
        $region22: #{tpu_custom_call.1} parent=19 // pred_check_branch
          %123 = sbr.rel (%p121) target = $region24
        $region23: #{tpu_custom_call.1} parent=19 // pred_region
          %s124 = sand.u32 %s25, 1
          %s125 = scalar_lea.sflag [#allocation3], %s124
          %s126 = sand.u32 %s25, 1
          %s127 = smul.addr %s126, 64
          %s128 = scalar_lea.vmem [#allocation2], %s127
          %s129 = smul.u32 16, %s15
          %131 = vsyncadd %s125, 0
          %s132 = smul.addr %s129, 4
          %s133 = scalar_lea.hbm %s0, %s132
          %s134 = sshll.u32 %s133, 4
          %s135 = int_to_ptr.hbm [resolvable:$true] %s134
          %s136 = sshll.u32 %s128, 4
          %s137 = int_to_ptr.vmem [resolvable:$true] %s136
          %142 = dma.hbm_to_vmem [thread:$0]  %s135, 1024, %s137, %s125, 64, 64, 4
        $region24: #{tpu_custom_call.1} parent=19 // pred_fallthru
          _
      $region20: #{tpu_custom_call.1} parent=5 // pred_fallthru
        _
      %p143 = scmp.le.s32.totalorder 1, %s15
      %p144 = scmp.lt.s32.totalorder %s15, 3
      %p145 = pnand %p143, %p144
      %p146 = pneg %p145
      // Predicated region
      $region25: #{tpu_custom_call.1} parent=5 // pred_check
        _
      $region26: #{tpu_custom_call.1} parent=5 // pred_check_branch
        %148 = sbr.rel (%p145) target = $region28
      $region27: #{tpu_custom_call.1} parent=5 // pred_region
        %s149 = ssub.s32 %s15, 1
        %s150 = sand.u32 %s28, 1
        %s151 = scalar_lea.sflag [#allocation3], %s150
        %s152 = sand.u32 %s28, 1
        %s153 = smul.addr %s152, 64
        %s154 = scalar_lea.vmem [#allocation2], %s153
        // Predicated region
        $region29: #{tpu_custom_call.1} parent=27 // pred_check
          %p155 = pneg %p41
        $region30: #{tpu_custom_call.1} parent=27 // pred_check_branch
          %157 = sbr.rel (%p155) target = $region32
        $region31: #{tpu_custom_call.1} parent=27 // pred_region
          %159 = dma.done %s151, 1024
        $region32: #{tpu_custom_call.1} parent=27 // pred_fallthru
          _
        // Predicated region
        $region33: #{tpu_custom_call.1} parent=27 // pred_check
          %p160 = pneg %p62
        $region34: #{tpu_custom_call.1} parent=27 // pred_check_branch
          %162 = sbr.rel (%p160) target = $region36
        $region35: #{tpu_custom_call.1} parent=27 // pred_region
          %164 = dma.done [#allocation6], 1024
        $region36: #{tpu_custom_call.1} parent=27 // pred_fallthru
          _
        %s165 = sand.u32 %s28, 1
        %s166 = scalar_lea.sflag [#allocation3], %s165
        %s167 = sand.u32 %s28, 1
        %s168 = smul.addr %s167, 64
        %s169 = scalar_lea.vmem [#allocation2], %s168
        %p170 = pneg %p41
        %p171 = pneg %p38
        %p172 = pneg %p62
        %p173 = pneg %p59
        %p174 = pneg %p88
        %p175 = pneg %p85
        %s176 = sand.u32 %s75, 1
        %s177 = scalar_lea.sflag [#allocation4], %s176
        %s178 = sand.u32 %s75, 1
        %s179 = smul.addr %s178, 64
        %s180 = scalar_lea.vmem [#allocation7], %s179
        %s181 = smul.u32 16, %s20
        %s182 = smul.u32 16, %s20
        %v183 = vld [vmem:[%s154] sm:$0xf]
        %v184 = vld [vmem:[%s154 + $0x4] sm:$0xf]
        %v185 = vld [vmem:[%s154 + $0x8] sm:$0xf]
        %v186 = vld [vmem:[%s154 + $0xc] sm:$0xf]
        %v187 = vld [vmem:[%s154 + $0x10] sm:$0xf]
        %v188 = vld [vmem:[%s154 + $0x14] sm:$0xf]
        %v189 = vld [vmem:[%s154 + $0x18] sm:$0xf]
        %v190 = vld [vmem:[%s154 + $0x1c] sm:$0xf]
        %v191 = vld [vmem:[%s154 + $0x20] sm:$0xf]
        %v192 = vld [vmem:[%s154 + $0x24] sm:$0xf]
        %v193 = vld [vmem:[%s154 + $0x28] sm:$0xf]
        %v194 = vld [vmem:[%s154 + $0x2c] sm:$0xf]
        %v195 = vld [vmem:[%s154 + $0x30] sm:$0xf]
        %v196 = vld [vmem:[%s154 + $0x34] sm:$0xf]
        %v197 = vld [vmem:[%s154 + $0x38] sm:$0xf]
        %v198 = vld [vmem:[%s154 + $0x3c] sm:$0xf]
        %v199 = vld [vmem:[#allocation5] sm:$0xf]
        %v200 = vld [vmem:[#allocation5 + $0x4] sm:$0xf]
        %v201 = vld [vmem:[#allocation5 + $0x8] sm:$0xf]
        %v202 = vld [vmem:[#allocation5 + $0xc] sm:$0xf]
        %v203 = vld [vmem:[#allocation5 + $0x10] sm:$0xf]
        %v204 = vld [vmem:[#allocation5 + $0x14] sm:$0xf]
        %v205 = vld [vmem:[#allocation5 + $0x18] sm:$0xf]
        %v206 = vld [vmem:[#allocation5 + $0x1c] sm:$0xf]
        %v207 = vld [vmem:[#allocation5 + $0x20] sm:$0xf]
        %v208 = vld [vmem:[#allocation5 + $0x24] sm:$0xf]
        %v209 = vld [vmem:[#allocation5 + $0x28] sm:$0xf]
        %v210 = vld [vmem:[#allocation5 + $0x2c] sm:$0xf]
        %v211 = vld [vmem:[#allocation5 + $0x30] sm:$0xf]
        %v212 = vld [vmem:[#allocation5 + $0x34] sm:$0xf]
        %v213 = vld [vmem:[#allocation5 + $0x38] sm:$0xf]
        %v214 = vld [vmem:[#allocation5 + $0x3c] sm:$0xf]
        %v231 = vunpack.c.l.b16 %v183
        %v232 = vunpack.c.l.b16 %v184
        %v233 = vunpack.c.l.b16 %v185
        %v234 = vunpack.c.l.b16 %v186
        %v235 = vunpack.c.l.b16 %v187
        %v236 = vunpack.c.l.b16 %v188
        %v237 = vunpack.c.l.b16 %v189
        %v238 = vunpack.c.l.b16 %v190
        %v239 = vunpack.c.l.b16 %v191
        %v240 = vunpack.c.l.b16 %v192
        %v241 = vunpack.c.l.b16 %v193
        %v242 = vunpack.c.l.b16 %v194
        %v243 = vunpack.c.l.b16 %v195
        %v244 = vunpack.c.l.b16 %v196
        %v245 = vunpack.c.l.b16 %v197
        %v246 = vunpack.c.l.b16 %v198
        %v247 = vpack.c.b16 %v232, %v231
        %v248 = vpack.c.b16 %v234, %v233
        %v249 = vpack.c.b16 %v236, %v235
        %v250 = vpack.c.b16 %v238, %v237
        %v251 = vpack.c.b16 %v240, %v239
        %v252 = vpack.c.b16 %v242, %v241
        %v253 = vpack.c.b16 %v244, %v243
        %v254 = vpack.c.b16 %v246, %v245
        %v279 = vunpack.c.l.b16 %v199
        %v280 = vunpack.c.l.b16 %v200
        %v281 = vunpack.c.l.b16 %v201
        %v282 = vunpack.c.l.b16 %v202
        %v283 = vunpack.c.l.b16 %v203
        %v284 = vunpack.c.l.b16 %v204
        %v285 = vunpack.c.l.b16 %v205
        %v286 = vunpack.c.l.b16 %v206
        %v287 = vunpack.c.l.b16 %v207
        %v288 = vunpack.c.l.b16 %v208
        %v289 = vunpack.c.l.b16 %v209
        %v290 = vunpack.c.l.b16 %v210
        %v291 = vunpack.c.l.b16 %v211
        %v292 = vunpack.c.l.b16 %v212
        %v293 = vunpack.c.l.b16 %v213
        %v294 = vunpack.c.l.b16 %v214
        %v295 = vpack.c.b16 %v280, %v279
        %v296 = vpack.c.b16 %v282, %v281
        %v297 = vpack.c.b16 %v284, %v283
        %v298 = vpack.c.b16 %v286, %v285
        %v299 = vpack.c.b16 %v288, %v287
        %v300 = vpack.c.b16 %v290, %v289
        %v301 = vpack.c.b16 %v292, %v291
        %v302 = vpack.c.b16 %v294, %v293
        %311 = vmatpush.bf16.msra.mxu0 %v302
        %312 = vmatpush.bf16.msra.mxu0 %v301
        %313 = vmatpush.bf16.msra.mxu0 %v300
        %314 = vmatpush.bf16.msra.mxu0 %v299
        %315 = vmatpush.bf16.msra.mxu0 %v298
        %316 = vmatpush.bf16.msra.mxu0 %v297
        %317 = vmatpush.bf16.msra.mxu0 %v296
        %318 = vmatpush.bf16.msra.mxu0 %v295
        %319 = vmatmul.bf16.gmra.mxu0 %v247
        %v320 = vpop.f32.mrf.mxu0
        %v321 = vadd.f32 0.0, %v320
        %v322 = vpop.f32.mrf.mxu0
        %v323 = vadd.f32 0.0, %v322
        %324 = vmatmul.bf16.gmra.mxu0 %v248
        %v325 = vpop.f32.mrf.mxu0
        %v326 = vadd.f32 0.0, %v325
        %v327 = vpop.f32.mrf.mxu0
        %v328 = vadd.f32 0.0, %v327
        %329 = vmatmul.bf16.gmra.mxu0 %v249
        %v330 = vpop.f32.mrf.mxu0
        %v331 = vadd.f32 0.0, %v330
        %v332 = vpop.f32.mrf.mxu0
        %v333 = vadd.f32 0.0, %v332
        %334 = vmatmul.bf16.gmra.mxu0 %v250
        %v335 = vpop.f32.mrf.mxu0
        %v336 = vadd.f32 0.0, %v335
        %v337 = vpop.f32.mrf.mxu0
        %v338 = vadd.f32 0.0, %v337
        %339 = vmatmul.bf16.gmra.mxu0 %v251
        %v340 = vpop.f32.mrf.mxu0
        %v341 = vadd.f32 0.0, %v340
        %v342 = vpop.f32.mrf.mxu0
        %v343 = vadd.f32 0.0, %v342
        %344 = vmatmul.bf16.gmra.mxu0 %v252
        %v345 = vpop.f32.mrf.mxu0
        %v346 = vadd.f32 0.0, %v345
        %v347 = vpop.f32.mrf.mxu0
        %v348 = vadd.f32 0.0, %v347
        %349 = vmatmul.bf16.gmra.mxu0 %v253
        %v350 = vpop.f32.mrf.mxu0
        %v351 = vadd.f32 0.0, %v350
        %v352 = vpop.f32.mrf.mxu0
        %v353 = vadd.f32 0.0, %v352
        %354 = vmatmul.bf16.gmra.mxu0 %v254
        %v355 = vpop.f32.mrf.mxu0
        %v356 = vadd.f32 0.0, %v355
        %v357 = vpop.f32.mrf.mxu0
        %v358 = vadd.f32 0.0, %v357
        %359 = vdwg.mxu0
        %v360 = vpack.c.bf16 %v321, %v321
        %v361 = vpack.c.bf16 %v323, %v323
        %v362 = vpack.c.bf16 %v326, %v326
        %v363 = vpack.c.bf16 %v328, %v328
        %v364 = vpack.c.bf16 %v331, %v331
        %v365 = vpack.c.bf16 %v333, %v333
        %v366 = vpack.c.bf16 %v336, %v336
        %v367 = vpack.c.bf16 %v338, %v338
        %v368 = vpack.c.bf16 %v341, %v341
        %v369 = vpack.c.bf16 %v343, %v343
        %v370 = vpack.c.bf16 %v346, %v346
        %v371 = vpack.c.bf16 %v348, %v348
        %v372 = vpack.c.bf16 %v351, %v351
        %v373 = vpack.c.bf16 %v353, %v353
        %v374 = vpack.c.bf16 %v356, %v356
        %v375 = vpack.c.bf16 %v358, %v358
        %376 = vst [vmem:[%s180] sm:$0xf] %v360
        %377 = vst [vmem:[%s180 + $0x4] sm:$0xf] %v361
        %378 = vst [vmem:[%s180 + $0x8] sm:$0xf] %v362
        %379 = vst [vmem:[%s180 + $0xc] sm:$0xf] %v363
        %380 = vst [vmem:[%s180 + $0x10] sm:$0xf] %v364
        %381 = vst [vmem:[%s180 + $0x14] sm:$0xf] %v365
        %382 = vst [vmem:[%s180 + $0x18] sm:$0xf] %v366
        %383 = vst [vmem:[%s180 + $0x1c] sm:$0xf] %v367
        %384 = vst [vmem:[%s180 + $0x20] sm:$0xf] %v368
        %385 = vst [vmem:[%s180 + $0x24] sm:$0xf] %v369
        %386 = vst [vmem:[%s180 + $0x28] sm:$0xf] %v370
        %387 = vst [vmem:[%s180 + $0x2c] sm:$0xf] %v371
        %388 = vst [vmem:[%s180 + $0x30] sm:$0xf] %v372
        %389 = vst [vmem:[%s180 + $0x34] sm:$0xf] %v373
        %390 = vst [vmem:[%s180 + $0x38] sm:$0xf] %v374
        %391 = vst [vmem:[%s180 + $0x3c] sm:$0xf] %v375
        %s392 = sand.u32 %s75, 1
        %s393 = scalar_lea.sflag [#allocation4], %s392
        %s394 = sand.u32 %s75, 1
        %s395 = smul.addr %s394, 64
        %s396 = scalar_lea.vmem [#allocation7], %s395
        // Predicated region
        $region37: #{tpu_custom_call.1} parent=27 // pred_check
          %p397 = pneg %p85
        $region38: #{tpu_custom_call.1} parent=27 // pred_check_branch
          %399 = sbr.rel (%p397) target = $region40
        $region39: #{tpu_custom_call.1} parent=27 // pred_region
          %s400 = smul.u32 16, %s20
          %402 = vsyncadd %s393, 0
          %s403 = smul.addr %s400, 4
          %s404 = scalar_lea.hbm %s2, %s403
          %s405 = sshll.u32 %s396, 4
          %s406 = int_to_ptr.vmem [resolvable:$true] %s405
          %s407 = sshll.u32 %s404, 4
          %s408 = int_to_ptr.hbm [resolvable:$true] %s407
          %413 = dma.vmem_to_hbm [thread:$0]  %s406, 1024, %s408, %s393, 64, 64, 4
        $region40: #{tpu_custom_call.1} parent=27 // pred_fallthru
          _
      $region28: #{tpu_custom_call.1} parent=5 // pred_fallthru
        _
      %p414 = scmp.le.s32.totalorder 2, %s15
      // Predicated region
      $region41: #{tpu_custom_call.1} parent=5 // pred_check
        %p415 = pneg %p414
      $region42: #{tpu_custom_call.1} parent=5 // pred_check_branch
        %417 = sbr.rel (%p415) target = $region44
      $region43: #{tpu_custom_call.1} parent=5 // pred_region
        %s418 = ssub.s32 %s15, 2
        // Predicated region
        $region45: #{tpu_custom_call.1} parent=43 // pred_check
          %p419 = pneg %p91
        $region46: #{tpu_custom_call.1} parent=43 // pred_check_branch
          %421 = sbr.rel (%p419) target = $region48
        $region47: #{tpu_custom_call.1} parent=43 // pred_region
          %s422 = sand.u32 %s76, 1
          %s423 = scalar_lea.sflag [#allocation4], %s422
          %s424 = sand.u32 %s76, 1
          %s425 = smul.addr %s424, 64
          %s426 = scalar_lea.vmem [#allocation7], %s425
          %428 = dma.done %s423, 1024
        $region48: #{tpu_custom_call.1} parent=43 // pred_fallthru
          _
      $region44: #{tpu_custom_call.1} parent=5 // pred_fallthru
        _
    $region6: #{tpu_custom_call.1} parent=1 // loop_footer
      %s19 = sadd.s32 1, %s15
    $region7: #{tpu_custom_call.1} parent=1 // loop_footer_branch
      %14 = sbr.rel target = $region3
    $region8: #{tpu_custom_call.1} parent=1 // loop_exit
      _
    %429 = vsyncpa [#allocation3], 1
    %s430 = scalar_lea.sflag [#allocation3], 1
    %431 = vsyncpa %s430, 1
    %432 = vsyncpa [#allocation6], 1
    %433 = vsyncpa [#allocation4], 1
    %s434 = scalar_lea.sflag [#allocation4], 1
    %435 = vsyncpa %s434, 1

</llo_original>
